<compile_context>
chip_gen: v5e
topology: v5e:2x2
jax: 0.10.0
libtpu: 0.0.40
codegen_flags: <defaults>
</compile_context>

<pallas_src>
import jax
import jax.numpy as jnp
from jax.experimental import pallas as pl
from jax.experimental.pallas import tpu as pltpu

LANE = 128
MAX_TILE = 512                       # ~85% of HBM roofline, fits v7x 64 MiB VMEM easily
VMEM_LIMIT_BYTES = 48 * 1024 * 1024  # explicit, with headroom on v7x (64 MiB physical)


def _round_up(x, m):
    return (x + m - 1) // m * m


def _pad2d(x, rows, cols):
    r, c = x.shape
    if r == rows and c == cols:
        return x
    return jnp.pad(x, ((0, rows - r), (0, cols - c)))


def _pick_tile(n, max_tile=MAX_TILE):
    """Padded node count and row/col tile (multiples of 128 for lane/sublane tiling)."""
    n128 = _round_up(n, LANE)
    if n128 <= max_tile:
        return n128, n128
    return _round_up(n, max_tile), max_tile


# ---------------------------------------------------------------------------
# Kernel 1: NodeApplyModule linear part (H @ W), row-tiled, used when F_out <= F_in
# so the adjacency contraction runs against the narrower feature dimension.
# ---------------------------------------------------------------------------
def _node_linear_kernel(h_ref, w_ref, xw_ref):
    xw_ref[...] = jnp.dot(
        h_ref[...], w_ref[...], preferred_element_type=jnp.float32
    ).astype(xw_ref.dtype)


def _node_linear(h_p, w_p, tile_n):
    n_p, f_in_p = h_p.shape
    f_out_p = w_p.shape[1]
    return pl.pallas_call(
        _node_linear_kernel,
        out_shape=jax.ShapeDtypeStruct((n_p, f_out_p), jnp.bfloat16),
        grid=(n_p // tile_n,),
        in_specs=[
            pl.BlockSpec((tile_n, f_in_p), lambda i: (i, 0)),
            pl.BlockSpec((f_in_p, f_out_p), lambda i: (0, 0)),
        ],
        out_specs=pl.BlockSpec((tile_n, f_out_p), lambda i: (i, 0)),
        compiler_params=pltpu.CompilerParams(
            dimension_semantics=("parallel",),
            vmem_limit_bytes=VMEM_LIMIT_BYTES,
        ),
    )(h_p, w_p)


# ---------------------------------------------------------------------------
# Kernel 2: tiled adjacency aggregation + (optional) Linear + Tanh finalize.
# Grid = (row tiles i [parallel], contraction tiles k [arbitrary, last]).
# ---------------------------------------------------------------------------
def _make_gcn_agg_kernel(apply_w_in_finalize, out_dtype):
    def body(adj_ref, x_ref, nsrc_ref, ndst_ref, w_ref, b_ref, out_ref, acc_ref):
        k = pl.program_id(1)

        @pl.when(k == 0)
        def _init():
            acc_ref[...] = jnp.zeros_like(acc_ref)

        # gcn_msg: scale streamed source features by source norm; bf16 feeds the MXU,
        # accumulation stays f32.
        msg = (x_ref[...].astype(jnp.float32) * nsrc_ref[...]).astype(jnp.bfloat16)
        acc_ref[...] += jnp.dot(adj_ref[...], msg, preferred_element_type=jnp.float32)

        @pl.when(k == pl.num_programs(1) - 1)
        def _finalize():
            # gcn_reduce epilogue (dst norm) + NodeApplyModule (Linear + Tanh).
            agg = acc_ref[...] * ndst_ref[...]
            if apply_w_in_finalize:
                agg = jnp.dot(agg, w_ref[...], preferred_element_type=jnp.float32)
            out_ref[...] = jnp.tanh(agg + b_ref[...]).astype(out_dtype)

    if apply_w_in_finalize:
        def kernel(adj_ref, x_ref, nsrc_ref, ndst_ref, w_ref, b_ref, out_ref, acc_ref):
            body(adj_ref, x_ref, nsrc_ref, ndst_ref, w_ref, b_ref, out_ref, acc_ref)
    else:
        def kernel(adj_ref, x_ref, nsrc_ref, ndst_ref, b_ref, out_ref, acc_ref):
            body(adj_ref, x_ref, nsrc_ref, ndst_ref, None, b_ref, out_ref, acc_ref)
    return kernel


def gcn_layer(adj_p, norm_p, h, w, b, *, n_valid, tile_n):
    """One GCN layer. adj_p (bf16) and norm_p (f32) are already padded to (n_p, n_p)/(n_p, 1)."""
    n_p = adj_p.shape[0]
    f_in, f_out = w.shape
    f_in_p = _round_up(f_in, LANE)
    f_out_p = _round_up(f_out, LANE)

    h_p = _pad2d(h.astype(jnp.float32), n_p, f_in_p)
    w_p = _pad2d(w.astype(jnp.float32), f_in_p, f_out_p)
    b_p = _pad2d(b.astype(jnp.float32), 1, f_out_p)

    # Associativity: contract adj against the smaller of F_in / F_out.
    premultiply = f_out <= f_in
    if premultiply:
        x = _node_linear(h_p, w_p, tile_n)          # (n_p, f_out_p) = H @ W, bf16
        f_x = f_out_p
    else:
        x = h_p.astype(jnp.bfloat16)                # (n_p, f_in_p), W applied in finalize
        f_x = f_in_p

    grid = (n_p // tile_n, n_p // tile_n)

    in_specs = [
        pl.BlockSpec((tile_n, tile_n), lambda i, k: (i, k)),   # adj tile (bf16 stream)
        pl.BlockSpec((tile_n, f_x), lambda i, k: (k, 0)),      # messages / features
        pl.BlockSpec((tile_n, 1), lambda i, k: (k, 0)),        # source norm
        pl.BlockSpec((tile_n, 1), lambda i, k: (i, 0)),        # destination norm
    ]
    operands = [adj_p, x, norm_p, norm_p]
    if not premultiply:
        in_specs.append(pl.BlockSpec((f_in_p, f_out_p), lambda i, k: (0, 0)))
        operands.append(w_p)
    in_specs.append(pl.BlockSpec((1, f_out_p), lambda i, k: (0, 0)))
    operands.append(b_p)

    flops = 2 * n_p * n_p * f_x + (0 if premultiply else 2 * n_p * f_in_p * f_out_p)
    bytes_accessed = (n_p * n_p * 2                        # adj (bf16), read once
                      + (n_p // tile_n) * n_p * f_x * 2    # x re-streamed per row tile
                      + n_p * f_out_p * 4)                 # output
    cost = pl.CostEstimate(flops=flops,
                           transcendentals=n_p * f_out_p,
                           bytes_accessed=bytes_accessed)

    out_p = pl.pallas_call(
        _make_gcn_agg_kernel(apply_w_in_finalize=not premultiply, out_dtype=jnp.float32),
        out_shape=jax.ShapeDtypeStruct((n_p, f_out_p), jnp.float32),
        grid=grid,
        in_specs=in_specs,
        out_specs=pl.BlockSpec((tile_n, f_out_p), lambda i, k: (i, 0)),
        scratch_shapes=[pltpu.VMEM((tile_n, f_x), jnp.float32)],
        compiler_params=pltpu.CompilerParams(
            dimension_semantics=("parallel", "arbitrary"),
            vmem_limit_bytes=VMEM_LIMIT_BYTES,
        ),
        cost_estimate=cost,
    )(*operands)

    return out_p[:n_valid, :f_out]


def init_linear(key, in_feats, out_feats):
    """Deterministic PyTorch-style nn.Linear init; weight returned as (in, out)."""
    kw, kb = jax.random.split(key)
    bound = 1.0 / jnp.sqrt(jnp.float32(in_feats))
    w = jax.random.uniform(kw, (in_feats, out_feats), jnp.float32, -bound, bound)
    b = jax.random.uniform(kb, (1, out_feats), jnp.float32, -bound, bound)
    return w, b


def net_forward(adj, features, params):
    """Net.forward: two stacked GCN layers (each ends in NodeApplyModule), returns (h1, h2)."""
    n = adj.shape[0]
    # Symmetric norm 1/sqrt(degree) (DGL-GCN convention); degree clamped to >= 1.
    deg = jnp.maximum(jnp.sum(adj, axis=1, keepdims=True), 1.0)
    norm = jax.lax.rsqrt(deg)

    n_p, tile_n = _pick_tile(n)
    adj_p = _pad2d(adj.astype(jnp.float32), n_p, n_p).astype(jnp.bfloat16)  # 0/1 exact in bf16
    norm_p = _pad2d(norm, n_p, 1)

    (w1, b1), (w2, b2) = params
    h1 = gcn_layer(adj_p, norm_p, features, w1, b1, n_valid=n, tile_n=tile_n)
    h2 = gcn_layer(adj_p, norm_p, h1, w2, b2, n_valid=n, tile_n=tile_n)
    return h1, h2


def _reference_layer(adj, h, norm, w, b):
    msg = h * norm
    agg = (adj @ msg) * norm
    return jnp.tanh(agg @ w + b)


if __name__ == "__main__":
    key = jax.random.PRNGKey(0)
    k_adj, k_feat, k_l1, k_l2 = jax.random.split(key, 4)

    # Small graph: 8 nodes, in_feats=8, hidden=16 (fixed by Net), out_feats=4
    N, in_feats, hidden, out_feats = 8, 8, 16, 4

    # Deterministic random adjacency with self-loops (dst-row, src-col)
    adj = (jax.random.uniform(k_adj, (N, N)) < 0.4).astype(jnp.float32)
    adj = jnp.maximum(adj, jnp.eye(N, dtype=jnp.float32))

    features = jax.random.normal(k_feat, (N, in_feats), jnp.float32)

    params = (init_linear(k_l1, in_feats, hidden),
              init_linear(k_l2, hidden, out_feats))

    h1, h2 = net_forward(adj, features, params)
    jax.block_until_ready((h1, h2))

    assert h1.shape == (N, hidden) and h2.shape == (N, out_feats)
    assert jnp.all(jnp.isfinite(h1)) and jnp.all(jnp.isfinite(h2))

    # Pure-JAX reference check (tolerance accounts for the bf16 MXU path).
    deg = jnp.maximum(jnp.sum(adj, axis=1, keepdims=True), 1.0)
    norm = jax.lax.rsqrt(deg)
    (w1, b1), (w2, b2) = params
    ref1 = _reference_layer(adj, features, norm, w1, b1)
    ref2 = _reference_layer(adj, ref1, norm, w2, b2)
    assert jnp.allclose(h1, ref1, atol=5e-2, rtol=5e-2)
    assert jnp.allclose(h2, ref2, atol=5e-2, rtol=5e-2)

    print("KERNEL_OK")
</pallas_src>

<mosaic_0001>
module attributes {stable_mosaic.version = 11 : i64} {
  func.func @kernel(%arg0: i32, %arg1: i32, %arg2: memref<128x128xbf16, #tpu.memory_space<vmem>>, %arg3: memref<128x128xbf16, #tpu.memory_space<vmem>>, %arg4: memref<128x1xf32, #tpu.memory_space<vmem>>, %arg5: memref<128x1xf32, #tpu.memory_space<vmem>>, %arg6: memref<128x128xf32, #tpu.memory_space<vmem>>, %arg7: memref<1x128xf32, #tpu.memory_space<vmem>>, %arg8: memref<128x128xf32, #tpu.memory_space<vmem>>, %arg9: memref<128x128xf32, #tpu.memory_space<vmem>>) attributes {dimension_semantics = [#tpu.dimension_semantics<parallel>, #tpu.dimension_semantics<arbitrary>], iteration_bounds = array<i64: 1, 1>, scalar_prefetch = 0 : i64, scratch_operands = 1 : i64, tpu.core_type = #tpu.core_type<tc>, window_params = [{transform_indices = @transform_0, window_bounds = array<i64: 128, 128>}, {transform_indices = @transform_1, window_bounds = array<i64: 128, 128>}, {transform_indices = @transform_2, window_bounds = array<i64: 128, 1>}, {transform_indices = @transform_3, window_bounds = array<i64: 128, 1>}, {pipeline_mode = #tpu.pipeline_mode<synchronous>, transform_indices = @transform_4, window_bounds = array<i64: 128, 128>}, {pipeline_mode = #tpu.pipeline_mode<synchronous>, transform_indices = @transform_5, window_bounds = array<i64: 1, 128>}, {transform_indices = @transform_6, window_bounds = array<i64: 128, 128>}]} {
    %c0_i32 = arith.constant 0 : i32
    %0 = arith.cmpi eq, %arg1, %c0_i32 : i32
    %1 = arith.extui %0 : i1 to i32
    %c0_i32_0 = arith.constant 0 : i32
    %2 = arith.cmpi ne, %1, %c0_i32_0 : i32
    scf.if %2 {
      %cst_12 = arith.constant 0.000000e+00 : f32
      %17 = vector.broadcast %cst_12 : f32 to vector<128x128xf32>
      %c0_13 = arith.constant 0 : index
      %c0_14 = arith.constant 0 : index
      %18 = vector.load %arg9[%c0_13, %c0_14] : memref<128x128xf32, #tpu.memory_space<vmem>>, vector<128x128xf32>
      tpu.vector_store %arg9[%c0_13, %c0_14], %17 {strides = array<i32>} : memref<128x128xf32, #tpu.memory_space<vmem>>, vector<128x128xf32>,
    } else {
    }
    %c0 = arith.constant 0 : index
    %c0_1 = arith.constant 0 : index
    %3 = vector.load %arg3[%c0, %c0_1] : memref<128x128xbf16, #tpu.memory_space<vmem>>, vector<128x128xbf16>
    %4 = arith.extf %3 : vector<128x128xbf16> to vector<128x128xf32>
    %c0_2 = arith.constant 0 : index
    %c0_3 = arith.constant 0 : index
    %5 = vector.load %arg4[%c0_2, %c0_3] : memref<128x1xf32, #tpu.memory_space<vmem>>, vector<128x1xf32>
    %6 = vector.broadcast %5 : vector<128x1xf32> to vector<128x128xf32>
    %7 = arith.mulf %4, %6 : vector<128x128xf32>
    %8 = arith.truncf %7 : vector<128x128xf32> to vector<128x128xbf16>
    %c0_4 = arith.constant 0 : index
    %c0_5 = arith.constant 0 : index
    %9 = vector.load %arg9[%c0_4, %c0_5] : memref<128x128xf32, #tpu.memory_space<vmem>>, vector<128x128xf32>
    %c0_6 = arith.constant 0 : index
    %c0_7 = arith.constant 0 : index
    %10 = vector.load %arg2[%c0_6, %c0_7] : memref<128x128xbf16, #tpu.memory_space<vmem>>, vector<128x128xbf16>
    %cst = arith.constant dense<0.000000e+00> : vector<128x128xf32>
    %11 = tpu.matmul %10, %8, %cst {dimension_numbers = #tpu.dot_dimension_numbers<[1], [0], [0], [1], [0, 0, 1, 1], [], []>} : vector<128x128xbf16>, vector<128x128xbf16>, vector<128x128xf32> -> vector<128x128xf32>
    %12 = arith.addf %9, %11 : vector<128x128xf32>
    %c0_8 = arith.constant 0 : index
    %c0_9 = arith.constant 0 : index
    %13 = vector.load %arg9[%c0_8, %c0_9] : memref<128x128xf32, #tpu.memory_space<vmem>>, vector<128x128xf32>
    tpu.vector_store %arg9[%c0_8, %c0_9], %12 {strides = array<i32>} : memref<128x128xf32, #tpu.memory_space<vmem>>, vector<128x128xf32>,
    %c0_i32_10 = arith.constant 0 : i32
    %14 = arith.cmpi eq, %arg1, %c0_i32_10 : i32
    %15 = arith.extui %14 : i1 to i32
    %c0_i32_11 = arith.constant 0 : i32
    %16 = arith.cmpi ne, %15, %c0_i32_11 : i32
    scf.if %16 {
      %c0_12 = arith.constant 0 : index
      %c0_13 = arith.constant 0 : index
      %17 = vector.load %arg9[%c0_12, %c0_13] : memref<128x128xf32, #tpu.memory_space<vmem>>, vector<128x128xf32>
      %c0_14 = arith.constant 0 : index
      %c0_15 = arith.constant 0 : index
      %18 = vector.load %arg5[%c0_14, %c0_15] : memref<128x1xf32, #tpu.memory_space<vmem>>, vector<128x1xf32>
      %19 = vector.broadcast %18 : vector<128x1xf32> to vector<128x128xf32>
      %20 = arith.mulf %17, %19 : vector<128x128xf32>
      %c0_16 = arith.constant 0 : index
      %c0_17 = arith.constant 0 : index
      %21 = vector.load %arg6[%c0_16, %c0_17] : memref<128x128xf32, #tpu.memory_space<vmem>>, vector<128x128xf32>
      %cst_18 = arith.constant dense<0.000000e+00> : vector<128x128xf32>
      %22 = tpu.matmul %20, %21, %cst_18 {dimension_numbers = #tpu.dot_dimension_numbers<[1], [0], [0], [1], [0, 0, 1, 1], [], []>} : vector<128x128xf32>, vector<128x128xf32>, vector<128x128xf32> -> vector<128x128xf32>
      %c0_19 = arith.constant 0 : index
      %c0_20 = arith.constant 0 : index
      %23 = vector.load %arg7[%c0_19, %c0_20] : memref<1x128xf32, #tpu.memory_space<vmem>>, vector<1x128xf32>
      %24 = vector.broadcast %23 : vector<1x128xf32> to vector<128x128xf32>
      %25 = arith.addf %22, %24 : vector<128x128xf32>
      %26 = math.tanh %25 : vector<128x128xf32>
      %c0_21 = arith.constant 0 : index
      %c0_22 = arith.constant 0 : index
      %27 = vector.load %arg8[%c0_21, %c0_22] : memref<128x128xf32, #tpu.memory_space<vmem>>, vector<128x128xf32>
      tpu.vector_store %arg8[%c0_21, %c0_22], %26 {strides = array<i32>} : memref<128x128xf32, #tpu.memory_space<vmem>>, vector<128x128xf32>,
    } else {
    }
    return
  }
  func.func @transform_0(%arg0: i32, %arg1: i32) -> (i32, i32) {
    %c0_i32 = arith.constant 0 : i32
    return %arg0, %arg1 : i32, i32
  }
  func.func @transform_1(%arg0: i32, %arg1: i32) -> (i32, i32) {
    %c0_i32 = arith.constant 0 : i32
    %c0_i32_0 = arith.constant 0 : i32
    return %arg1, %c0_i32 : i32, i32
  }
  func.func @transform_2(%arg0: i32, %arg1: i32) -> (i32, i32) {
    %c0_i32 = arith.constant 0 : i32
    %c0_i32_0 = arith.constant 0 : i32
    return %arg1, %c0_i32 : i32, i32
  }
  func.func @transform_3(%arg0: i32, %arg1: i32) -> (i32, i32) {
    %c0_i32 = arith.constant 0 : i32
    %c0_i32_0 = arith.constant 0 : i32
    return %arg0, %c0_i32 : i32, i32
  }
  func.func @transform_4(%arg0: i32, %arg1: i32) -> (i32, i32) {
    %c0_i32 = arith.constant 0 : i32
    %c0_i32_0 = arith.constant 0 : i32
    %c0_i32_1 = arith.constant 0 : i32
    return %c0_i32, %c0_i32_0 : i32, i32
  }
  func.func @transform_5(%arg0: i32, %arg1: i32) -> (i32, i32) {
    %c0_i32 = arith.constant 0 : i32
    %c0_i32_0 = arith.constant 0 : i32
    %c0_i32_1 = arith.constant 0 : i32
    return %c0_i32, %c0_i32_0 : i32, i32
  }
  func.func @transform_6(%arg0: i32, %arg1: i32) -> (i32, i32) {
    %c0_i32 = arith.constant 0 : i32
    %c0_i32_0 = arith.constant 0 : i32
    return %arg0, %c0_i32 : i32, i32
  }
}

</mosaic_0001>

<llo_original>
// kernel: tpu_custom_call.1
$region0: #{tpu_custom_call.1}
  #allocation0 [shape = 'u32[]', space=smem, size = 0x4, offset = 0x4, fixed_abs, tag = 'smem constant byte address 0x4 - core index']
  #allocation1 [shape = 'u32[72,128]{1,0:T(1,128)}', space=vmem, size = 0x9000, scoped, tag = 'internal scratch']
  #allocation2 [shape = 'f32[128,128]{1,0:T(8,128)}', space=vmem, size = 0x10000, scoped, tag = 'scratch operand']
  %s0 = inlined_call_operand.vmem [shape: bf16[128,128], index: 0, kind: input, shape index: {}]
  %s1 = inlined_call_operand.vmem [shape: bf16[128,128], index: 1, kind: input, shape index: {}]
  %s2 = inlined_call_operand.vmem [shape: f32[128,1], index: 2, kind: input, shape index: {}]
  %s3 = inlined_call_operand.vmem [shape: f32[128,1], index: 3, kind: input, shape index: {}]
  %s4 = inlined_call_operand.vmem [shape: f32[128,128], index: 4, kind: input, shape index: {}]
  %s5 = inlined_call_operand.vmem [shape: f32[1,128], index: 5, kind: input, shape index: {}]
  %s6 = inlined_call_operand.hbm [shape: f32[128,128], index: 6, kind: output, shape index: {}]
  %s7 = sld [smem:[#allocation0]]
  $region42: #{tpu_custom_call.1} parent=0
    _
  %s9 = ssub.s32 1, %s7
  %s10 = scalar_select 0, %s9, %s7
  $region1: #{tpu_custom_call.1} parent=0
    #allocation3 [shape = 'u8[65536]{0}', space=vmem, size = 0x10000, scoped, tag = 'output window, operand 0, single buffered']
    #allocation4 [shape = 's32[1]{0}', space=sflag, size = 0x4, scoped, tag = 'scoped memory for tpu_custom_call.1']
    %11 = vsyncpa [#allocation4], 0
    // Predicated region
    $region2: #{tpu_custom_call.1} parent=1 // pred_check
      _
    $region3: #{tpu_custom_call.1} parent=1 // pred_check_branch
      %13 = sbr.rel (0) target = $region5
    $region4: #{tpu_custom_call.1} parent=1 // pred_region
      _
    $region5: #{tpu_custom_call.1} parent=1 // pred_fallthru
      _
    // Predicated region
    $region6: #{tpu_custom_call.1} parent=1 // pred_check
      _
    $region7: #{tpu_custom_call.1} parent=1 // pred_check_branch
      %15 = sbr.rel (0) target = $region9
    $region8: #{tpu_custom_call.1} parent=1 // pred_region
      _
    $region9: #{tpu_custom_call.1} parent=1 // pred_fallthru
      _
    // Predicated region
    $region10: #{tpu_custom_call.1} parent=1 // pred_check
      _
    $region11: #{tpu_custom_call.1} parent=1 // pred_check_branch
      %17 = sbr.rel (0) target = $region13
    $region12: #{tpu_custom_call.1} parent=1 // pred_region
      _
    $region13: #{tpu_custom_call.1} parent=1 // pred_fallthru
      _
    // Predicated region
    $region14: #{tpu_custom_call.1} parent=1 // pred_check
      _
    $region15: #{tpu_custom_call.1} parent=1 // pred_check_branch
      %19 = sbr.rel (0) target = $region17
    $region16: #{tpu_custom_call.1} parent=1 // pred_region
      _
    $region17: #{tpu_custom_call.1} parent=1 // pred_fallthru
      _
    // Predicated region
    $region18: #{tpu_custom_call.1} parent=1 // pred_check
      _
    $region19: #{tpu_custom_call.1} parent=1 // pred_check_branch
      %21 = sbr.rel (0) target = $region21
    $region20: #{tpu_custom_call.1} parent=1 // pred_region
      _
    $region21: #{tpu_custom_call.1} parent=1 // pred_fallthru
      _
    // Predicated region
    $region22: #{tpu_custom_call.1} parent=1 // pred_check
      _
    $region23: #{tpu_custom_call.1} parent=1 // pred_check_branch
      %23 = sbr.rel (0) target = $region25
    $region24: #{tpu_custom_call.1} parent=1 // pred_region
      _
    $region25: #{tpu_custom_call.1} parent=1 // pred_fallthru
      _
    %p24 = scmp.eq.s32.totalorder 0, 0
    // Predicated region
    $region26: #{tpu_custom_call.1} parent=1 // pred_check
      %p25 = pneg %p24
    $region27: #{tpu_custom_call.1} parent=1 // pred_check_branch
      %27 = sbr.rel (%p25) target = $region29
    $region28: #{tpu_custom_call.1} parent=1 // pred_region
      %28 = vst [vmem:[#allocation2] sm:$0xff] 0.0
      %29 = vst [vmem:[#allocation2 + $0x8] sm:$0xff] 0.0
      %30 = vst [vmem:[#allocation2 + $0x10] sm:$0xff] 0.0
      %31 = vst [vmem:[#allocation2 + $0x18] sm:$0xff] 0.0
      %32 = vst [vmem:[#allocation2 + $0x20] sm:$0xff] 0.0
      %33 = vst [vmem:[#allocation2 + $0x28] sm:$0xff] 0.0
      %34 = vst [vmem:[#allocation2 + $0x30] sm:$0xff] 0.0
      %35 = vst [vmem:[#allocation2 + $0x38] sm:$0xff] 0.0
      %36 = vst [vmem:[#allocation2 + $0x40] sm:$0xff] 0.0
      %37 = vst [vmem:[#allocation2 + $0x48] sm:$0xff] 0.0
      %38 = vst [vmem:[#allocation2 + $0x50] sm:$0xff] 0.0
      %39 = vst [vmem:[#allocation2 + $0x58] sm:$0xff] 0.0
      %40 = vst [vmem:[#allocation2 + $0x60] sm:$0xff] 0.0
      %41 = vst [vmem:[#allocation2 + $0x68] sm:$0xff] 0.0
      %42 = vst [vmem:[#allocation2 + $0x70] sm:$0xff] 0.0
      %43 = vst [vmem:[#allocation2 + $0x78] sm:$0xff] 0.0
    $region29: #{tpu_custom_call.1} parent=1 // pred_fallthru
      _
    %v44 = vld [vmem:[%s1] sm:$0xf]
    %v45 = vld [vmem:[%s1 + $0x4] sm:$0xf]
    %v46 = vld [vmem:[%s1 + $0x8] sm:$0xf]
    %v47 = vld [vmem:[%s1 + $0xc] sm:$0xf]
    %v48 = vld [vmem:[%s1 + $0x10] sm:$0xf]
    %v49 = vld [vmem:[%s1 + $0x14] sm:$0xf]
    %v50 = vld [vmem:[%s1 + $0x18] sm:$0xf]
    %v51 = vld [vmem:[%s1 + $0x1c] sm:$0xf]
    %v52 = vld [vmem:[%s1 + $0x20] sm:$0xf]
    %v53 = vld [vmem:[%s1 + $0x24] sm:$0xf]
    %v54 = vld [vmem:[%s1 + $0x28] sm:$0xf]
    %v55 = vld [vmem:[%s1 + $0x2c] sm:$0xf]
    %v56 = vld [vmem:[%s1 + $0x30] sm:$0xf]
    %v57 = vld [vmem:[%s1 + $0x34] sm:$0xf]
    %v58 = vld [vmem:[%s1 + $0x38] sm:$0xf]
    %v59 = vld [vmem:[%s1 + $0x3c] sm:$0xf]
    %v60 = vunpack.c.l.bf16 %v44
    %v61 = vunpack.c.l.bf16 %v45
    %v62 = vunpack.c.l.bf16 %v46
    %v63 = vunpack.c.l.bf16 %v47
    %v64 = vunpack.c.l.bf16 %v48
    %v65 = vunpack.c.l.bf16 %v49
    %v66 = vunpack.c.l.bf16 %v50
    %v67 = vunpack.c.l.bf16 %v51
    %v68 = vunpack.c.l.bf16 %v52
    %v69 = vunpack.c.l.bf16 %v53
    %v70 = vunpack.c.l.bf16 %v54
    %v71 = vunpack.c.l.bf16 %v55
    %v72 = vunpack.c.l.bf16 %v56
    %v73 = vunpack.c.l.bf16 %v57
    %v74 = vunpack.c.l.bf16 %v58
    %v75 = vunpack.c.l.bf16 %v59
    %v76 = vld [vmem:[%s2] sm:$0xff]
    %v77 = vld [vmem:[%s2 + $0x8] sm:$0xff]
    %v78 = vld [vmem:[%s2 + $0x10] sm:$0xff]
    %v79 = vld [vmem:[%s2 + $0x18] sm:$0xff]
    %v80 = vld [vmem:[%s2 + $0x20] sm:$0xff]
    %v81 = vld [vmem:[%s2 + $0x28] sm:$0xff]
    %v82 = vld [vmem:[%s2 + $0x30] sm:$0xff]
    %v83 = vld [vmem:[%s2 + $0x38] sm:$0xff]
    %v84 = vld [vmem:[%s2 + $0x40] sm:$0xff]
    %v85 = vld [vmem:[%s2 + $0x48] sm:$0xff]
    %v86 = vld [vmem:[%s2 + $0x50] sm:$0xff]
    %v87 = vld [vmem:[%s2 + $0x58] sm:$0xff]
    %v88 = vld [vmem:[%s2 + $0x60] sm:$0xff]
    %v89 = vld [vmem:[%s2 + $0x68] sm:$0xff]
    %v90 = vld [vmem:[%s2 + $0x70] sm:$0xff]
    %v91 = vld [vmem:[%s2 + $0x78] sm:$0xff]
    %93 = vset.pattern.permute.xlu0 0
    %94 = vperm.xlu0 %93, %v76
    %v95 = vpop.permute.xlu0 %94
    %98 = vset.pattern.permute.xlu0 0
    %99 = vperm.xlu0 %98, %v77
    %v100 = vpop.permute.xlu0 %99
    %103 = vset.pattern.permute.xlu0 0
    %104 = vperm.xlu0 %103, %v78
    %v105 = vpop.permute.xlu0 %104
    %108 = vset.pattern.permute.xlu0 0
    %109 = vperm.xlu0 %108, %v79
    %v110 = vpop.permute.xlu0 %109
    %113 = vset.pattern.permute.xlu0 0
    %114 = vperm.xlu0 %113, %v80
    %v115 = vpop.permute.xlu0 %114
    %118 = vset.pattern.permute.xlu0 0
    %119 = vperm.xlu0 %118, %v81
    %v120 = vpop.permute.xlu0 %119
    %123 = vset.pattern.permute.xlu0 0
    %124 = vperm.xlu0 %123, %v82
    %v125 = vpop.permute.xlu0 %124
    %128 = vset.pattern.permute.xlu0 0
    %129 = vperm.xlu0 %128, %v83
    %v130 = vpop.permute.xlu0 %129
    %133 = vset.pattern.permute.xlu0 0
    %134 = vperm.xlu0 %133, %v84
    %v135 = vpop.permute.xlu0 %134
    %138 = vset.pattern.permute.xlu0 0
    %139 = vperm.xlu0 %138, %v85
    %v140 = vpop.permute.xlu0 %139
    %143 = vset.pattern.permute.xlu0 0
    %144 = vperm.xlu0 %143, %v86
    %v145 = vpop.permute.xlu0 %144
    %148 = vset.pattern.permute.xlu0 0
    %149 = vperm.xlu0 %148, %v87
    %v150 = vpop.permute.xlu0 %149
    %153 = vset.pattern.permute.xlu0 0
    %154 = vperm.xlu0 %153, %v88
    %v155 = vpop.permute.xlu0 %154
    %158 = vset.pattern.permute.xlu0 0
    %159 = vperm.xlu0 %158, %v89
    %v160 = vpop.permute.xlu0 %159
    %163 = vset.pattern.permute.xlu0 0
    %164 = vperm.xlu0 %163, %v90
    %v165 = vpop.permute.xlu0 %164
    %168 = vset.pattern.permute.xlu0 0
    %169 = vperm.xlu0 %168, %v91
    %v170 = vpop.permute.xlu0 %169
    %v172 = vmul.f32 %v60, %v95
    %v173 = vmul.f32 %v61, %v100
    %v174 = vmul.f32 %v62, %v105
    %v175 = vmul.f32 %v63, %v110
    %v176 = vmul.f32 %v64, %v115
    %v177 = vmul.f32 %v65, %v120
    %v178 = vmul.f32 %v66, %v125
    %v179 = vmul.f32 %v67, %v130
    %v180 = vmul.f32 %v68, %v135
    %v181 = vmul.f32 %v69, %v140
    %v182 = vmul.f32 %v70, %v145
    %v183 = vmul.f32 %v71, %v150
    %v184 = vmul.f32 %v72, %v155
    %v185 = vmul.f32 %v73, %v160
    %v186 = vmul.f32 %v74, %v165
    %v187 = vmul.f32 %v75, %v170
    %v188 = vpack.c.bf16 %v173, %v172
    %v189 = vpack.c.bf16 %v175, %v174
    %v190 = vpack.c.bf16 %v177, %v176
    %v191 = vpack.c.bf16 %v179, %v178
    %v192 = vpack.c.bf16 %v181, %v180
    %v193 = vpack.c.bf16 %v183, %v182
    %v194 = vpack.c.bf16 %v185, %v184
    %v195 = vpack.c.bf16 %v187, %v186
    %v196 = vld [vmem:[#allocation2] sm:$0xff]
    %v197 = vld [vmem:[#allocation2 + $0x8] sm:$0xff]
    %v198 = vld [vmem:[#allocation2 + $0x10] sm:$0xff]
    %v199 = vld [vmem:[#allocation2 + $0x18] sm:$0xff]
    %v200 = vld [vmem:[#allocation2 + $0x20] sm:$0xff]
    %v201 = vld [vmem:[#allocation2 + $0x28] sm:$0xff]
    %v202 = vld [vmem:[#allocation2 + $0x30] sm:$0xff]
    %v203 = vld [vmem:[#allocation2 + $0x38] sm:$0xff]
    %v204 = vld [vmem:[#allocation2 + $0x40] sm:$0xff]
    %v205 = vld [vmem:[#allocation2 + $0x48] sm:$0xff]
    %v206 = vld [vmem:[#allocation2 + $0x50] sm:$0xff]
    %v207 = vld [vmem:[#allocation2 + $0x58] sm:$0xff]
    %v208 = vld [vmem:[#allocation2 + $0x60] sm:$0xff]
    %v209 = vld [vmem:[#allocation2 + $0x68] sm:$0xff]
    %v210 = vld [vmem:[#allocation2 + $0x70] sm:$0xff]
    %v211 = vld [vmem:[#allocation2 + $0x78] sm:$0xff]
    %v212 = vld [vmem:[%s0] sm:$0xf]
    %v213 = vld [vmem:[%s0 + $0x4] sm:$0xf]
    %v214 = vld [vmem:[%s0 + $0x8] sm:$0xf]
    %v215 = vld [vmem:[%s0 + $0xc] sm:$0xf]
    %v216 = vld [vmem:[%s0 + $0x10] sm:$0xf]
    %v217 = vld [vmem:[%s0 + $0x14] sm:$0xf]
    %v218 = vld [vmem:[%s0 + $0x18] sm:$0xf]
    %v219 = vld [vmem:[%s0 + $0x1c] sm:$0xf]
    %v220 = vld [vmem:[%s0 + $0x20] sm:$0xf]
    %v221 = vld [vmem:[%s0 + $0x24] sm:$0xf]
    %v222 = vld [vmem:[%s0 + $0x28] sm:$0xf]
    %v223 = vld [vmem:[%s0 + $0x2c] sm:$0xf]
    %v224 = vld [vmem:[%s0 + $0x30] sm:$0xf]
    %v225 = vld [vmem:[%s0 + $0x34] sm:$0xf]
    %v226 = vld [vmem:[%s0 + $0x38] sm:$0xf]
    %v227 = vld [vmem:[%s0 + $0x3c] sm:$0xf]
    %v244 = vunpack.c.l.b16 %v212
    %v245 = vunpack.c.l.b16 %v213
    %v246 = vunpack.c.l.b16 %v214
    %v247 = vunpack.c.l.b16 %v215
    %v248 = vunpack.c.l.b16 %v216
    %v249 = vunpack.c.l.b16 %v217
    %v250 = vunpack.c.l.b16 %v218
    %v251 = vunpack.c.l.b16 %v219
    %v252 = vunpack.c.l.b16 %v220
    %v253 = vunpack.c.l.b16 %v221
    %v254 = vunpack.c.l.b16 %v222
    %v255 = vunpack.c.l.b16 %v223
    %v256 = vunpack.c.l.b16 %v224
    %v257 = vunpack.c.l.b16 %v225
    %v258 = vunpack.c.l.b16 %v226
    %v259 = vunpack.c.l.b16 %v227
    %v260 = vpack.c.b16 %v245, %v244
    %v261 = vpack.c.b16 %v247, %v246
    %v262 = vpack.c.b16 %v249, %v248
    %v263 = vpack.c.b16 %v251, %v250
    %v264 = vpack.c.b16 %v253, %v252
    %v265 = vpack.c.b16 %v255, %v254
    %v266 = vpack.c.b16 %v257, %v256
    %v267 = vpack.c.b16 %v259, %v258
    %276 = vmatpush.bf16.msra.mxu0 %v195
    %277 = vmatpush.bf16.msra.mxu0 %v194
    %278 = vmatpush.bf16.msra.mxu0 %v193
    %279 = vmatpush.bf16.msra.mxu0 %v192
    %280 = vmatpush.bf16.msra.mxu0 %v191
    %281 = vmatpush.bf16.msra.mxu0 %v190
    %282 = vmatpush.bf16.msra.mxu0 %v189
    %283 = vmatpush.bf16.msra.mxu0 %v188
    %284 = vmatmul.bf16.gmra.mxu0 %v260
    %v285 = vpop.f32.mrf.mxu0
    %v286 = vadd.f32 0.0, %v285
    %v287 = vpop.f32.mrf.mxu0
    %v288 = vadd.f32 0.0, %v287
    %289 = vmatmul.bf16.gmra.mxu0 %v261
    %v290 = vpop.f32.mrf.mxu0
    %v291 = vadd.f32 0.0, %v290
    %v292 = vpop.f32.mrf.mxu0
    %v293 = vadd.f32 0.0, %v292
    %294 = vmatmul.bf16.gmra.mxu0 %v262
    %v295 = vpop.f32.mrf.mxu0
    %v296 = vadd.f32 0.0, %v295
    %v297 = vpop.f32.mrf.mxu0
    %v298 = vadd.f32 0.0, %v297
    %299 = vmatmul.bf16.gmra.mxu0 %v263
    %v300 = vpop.f32.mrf.mxu0
    %v301 = vadd.f32 0.0, %v300
    %v302 = vpop.f32.mrf.mxu0
    %v303 = vadd.f32 0.0, %v302
    %304 = vmatmul.bf16.gmra.mxu0 %v264
    %v305 = vpop.f32.mrf.mxu0
    %v306 = vadd.f32 0.0, %v305
    %v307 = vpop.f32.mrf.mxu0
    %v308 = vadd.f32 0.0, %v307
    %309 = vmatmul.bf16.gmra.mxu0 %v265
    %v310 = vpop.f32.mrf.mxu0
    %v311 = vadd.f32 0.0, %v310
    %v312 = vpop.f32.mrf.mxu0
    %v313 = vadd.f32 0.0, %v312
    %314 = vmatmul.bf16.gmra.mxu0 %v266
    %v315 = vpop.f32.mrf.mxu0
    %v316 = vadd.f32 0.0, %v315
    %v317 = vpop.f32.mrf.mxu0
    %v318 = vadd.f32 0.0, %v317
    %319 = vmatmul.bf16.gmra.mxu0 %v267
    %v320 = vpop.f32.mrf.mxu0
    %v321 = vadd.f32 0.0, %v320
    %v322 = vpop.f32.mrf.mxu0
    %v323 = vadd.f32 0.0, %v322
    %324 = vdwg.mxu0
    %v325 = vadd.f32 %v196, %v286
    %v326 = vadd.f32 %v197, %v288
    %v327 = vadd.f32 %v198, %v291
    %v328 = vadd.f32 %v199, %v293
    %v329 = vadd.f32 %v200, %v296
    %v330 = vadd.f32 %v201, %v298
    %v331 = vadd.f32 %v202, %v301
    %v332 = vadd.f32 %v203, %v303
    %v333 = vadd.f32 %v204, %v306
    %v334 = vadd.f32 %v205, %v308
    %v335 = vadd.f32 %v206, %v311
    %v336 = vadd.f32 %v207, %v313
    %v337 = vadd.f32 %v208, %v316
    %v338 = vadd.f32 %v209, %v318
    %v339 = vadd.f32 %v210, %v321
    %v340 = vadd.f32 %v211, %v323
    %341 = vst [vmem:[#allocation2] sm:$0xff] %v325
    %342 = vst [vmem:[#allocation2 + $0x8] sm:$0xff] %v326
    %343 = vst [vmem:[#allocation2 + $0x10] sm:$0xff] %v327
    %344 = vst [vmem:[#allocation2 + $0x18] sm:$0xff] %v328
    %345 = vst [vmem:[#allocation2 + $0x20] sm:$0xff] %v329
    %346 = vst [vmem:[#allocation2 + $0x28] sm:$0xff] %v330
    %347 = vst [vmem:[#allocation2 + $0x30] sm:$0xff] %v331
    %348 = vst [vmem:[#allocation2 + $0x38] sm:$0xff] %v332
    %349 = vst [vmem:[#allocation2 + $0x40] sm:$0xff] %v333
    %350 = vst [vmem:[#allocation2 + $0x48] sm:$0xff] %v334
    %351 = vst [vmem:[#allocation2 + $0x50] sm:$0xff] %v335
    %352 = vst [vmem:[#allocation2 + $0x58] sm:$0xff] %v336
    %353 = vst [vmem:[#allocation2 + $0x60] sm:$0xff] %v337
    %354 = vst [vmem:[#allocation2 + $0x68] sm:$0xff] %v338
    %355 = vst [vmem:[#allocation2 + $0x70] sm:$0xff] %v339
    %356 = vst [vmem:[#allocation2 + $0x78] sm:$0xff] %v340
    // Predicated region
    $region30: #{tpu_custom_call.1} parent=1 // pred_check
      %p357 = pneg %p24
    $region31: #{tpu_custom_call.1} parent=1 // pred_check_branch
      %359 = sbr.rel (%p357) target = $region33
    $region32: #{tpu_custom_call.1} parent=1 // pred_region
      %v360 = vld [vmem:[#allocation2] sm:$0xff]
      %v361 = vld [vmem:[#allocation2 + $0x8] sm:$0xff]
      %v362 = vld [vmem:[#allocation2 + $0x10] sm:$0xff]
      %v363 = vld [vmem:[#allocation2 + $0x18] sm:$0xff]
      %v364 = vld [vmem:[#allocation2 + $0x20] sm:$0xff]
      %v365 = vld [vmem:[#allocation2 + $0x28] sm:$0xff]
      %v366 = vld [vmem:[#allocation2 + $0x30] sm:$0xff]
      %v367 = vld [vmem:[#allocation2 + $0x38] sm:$0xff]
      %v368 = vld [vmem:[#allocation2 + $0x40] sm:$0xff]
      %v369 = vld [vmem:[#allocation2 + $0x48] sm:$0xff]
      %v370 = vld [vmem:[#allocation2 + $0x50] sm:$0xff]
      %v371 = vld [vmem:[#allocation2 + $0x58] sm:$0xff]
      %v372 = vld [vmem:[#allocation2 + $0x60] sm:$0xff]
      %v373 = vld [vmem:[#allocation2 + $0x68] sm:$0xff]
      %v374 = vld [vmem:[#allocation2 + $0x70] sm:$0xff]
      %v375 = vld [vmem:[#allocation2 + $0x78] sm:$0xff]
      %v376 = vld [vmem:[%s3] sm:$0xff]
      %v377 = vld [vmem:[%s3 + $0x8] sm:$0xff]
      %v378 = vld [vmem:[%s3 + $0x10] sm:$0xff]
      %v379 = vld [vmem:[%s3 + $0x18] sm:$0xff]
      %v380 = vld [vmem:[%s3 + $0x20] sm:$0xff]
      %v381 = vld [vmem:[%s3 + $0x28] sm:$0xff]
      %v382 = vld [vmem:[%s3 + $0x30] sm:$0xff]
      %v383 = vld [vmem:[%s3 + $0x38] sm:$0xff]
      %v384 = vld [vmem:[%s3 + $0x40] sm:$0xff]
      %v385 = vld [vmem:[%s3 + $0x48] sm:$0xff]
      %v386 = vld [vmem:[%s3 + $0x50] sm:$0xff]
      %v387 = vld [vmem:[%s3 + $0x58] sm:$0xff]
      %v388 = vld [vmem:[%s3 + $0x60] sm:$0xff]
      %v389 = vld [vmem:[%s3 + $0x68] sm:$0xff]
      %v390 = vld [vmem:[%s3 + $0x70] sm:$0xff]
      %v391 = vld [vmem:[%s3 + $0x78] sm:$0xff]
      %393 = vset.pattern.permute.xlu0 0
      %394 = vperm.xlu0 %393, %v376
      %v395 = vpop.permute.xlu0 %394
      %398 = vset.pattern.permute.xlu0 0
      %399 = vperm.xlu0 %398, %v377
      %v400 = vpop.permute.xlu0 %399
      %403 = vset.pattern.permute.xlu0 0
      %404 = vperm.xlu0 %403, %v378
      %v405 = vpop.permute.xlu0 %404
      %408 = vset.pattern.permute.xlu0 0
      %409 = vperm.xlu0 %408, %v379
      %v410 = vpop.permute.xlu0 %409
      %413 = vset.pattern.permute.xlu0 0
      %414 = vperm.xlu0 %413, %v380
      %v415 = vpop.permute.xlu0 %414
      %418 = vset.pattern.permute.xlu0 0
      %419 = vperm.xlu0 %418, %v381
      %v420 = vpop.permute.xlu0 %419
      %423 = vset.pattern.permute.xlu0 0
      %424 = vperm.xlu0 %423, %v382
      %v425 = vpop.permute.xlu0 %424
      %428 = vset.pattern.permute.xlu0 0
      %429 = vperm.xlu0 %428, %v383
      %v430 = vpop.permute.xlu0 %429
      %433 = vset.pattern.permute.xlu0 0
      %434 = vperm.xlu0 %433, %v384
      %v435 = vpop.permute.xlu0 %434
      %438 = vset.pattern.permute.xlu0 0
      %439 = vperm.xlu0 %438, %v385
      %v440 = vpop.permute.xlu0 %439
      %443 = vset.pattern.permute.xlu0 0
      %444 = vperm.xlu0 %443, %v386
      %v445 = vpop.permute.xlu0 %444
      %448 = vset.pattern.permute.xlu0 0
      %449 = vperm.xlu0 %448, %v387
      %v450 = vpop.permute.xlu0 %449
      %453 = vset.pattern.permute.xlu0 0
      %454 = vperm.xlu0 %453, %v388
      %v455 = vpop.permute.xlu0 %454
      %458 = vset.pattern.permute.xlu0 0
      %459 = vperm.xlu0 %458, %v389
      %v460 = vpop.permute.xlu0 %459
      %463 = vset.pattern.permute.xlu0 0
      %464 = vperm.xlu0 %463, %v390
      %v465 = vpop.permute.xlu0 %464
      %468 = vset.pattern.permute.xlu0 0
      %469 = vperm.xlu0 %468, %v391
      %v470 = vpop.permute.xlu0 %469
      %v472 = vmul.f32 %v360, %v395
      %v473 = vmul.f32 %v361, %v400
      %v474 = vmul.f32 %v362, %v405
      %v475 = vmul.f32 %v363, %v410
      %v476 = vmul.f32 %v364, %v415
      %v477 = vmul.f32 %v365, %v420
      %v478 = vmul.f32 %v366, %v425
      %v479 = vmul.f32 %v367, %v430
      %v480 = vmul.f32 %v368, %v435
      %v481 = vmul.f32 %v369, %v440
      %v482 = vmul.f32 %v370, %v445
      %v483 = vmul.f32 %v371, %v450
      %v484 = vmul.f32 %v372, %v455
      %v485 = vmul.f32 %v373, %v460
      %v486 = vmul.f32 %v374, %v465
      %v487 = vmul.f32 %v375, %v470
      %v488 = vld [vmem:[%s4] sm:$0xff]
      %v489 = vld [vmem:[%s4 + $0x8] sm:$0xff]
      %v490 = vld [vmem:[%s4 + $0x10] sm:$0xff]
      %v491 = vld [vmem:[%s4 + $0x18] sm:$0xff]
      %v492 = vld [vmem:[%s4 + $0x20] sm:$0xff]
      %v493 = vld [vmem:[%s4 + $0x28] sm:$0xff]
      %v494 = vld [vmem:[%s4 + $0x30] sm:$0xff]
      %v495 = vld [vmem:[%s4 + $0x38] sm:$0xff]
      %v496 = vld [vmem:[%s4 + $0x40] sm:$0xff]
      %v497 = vld [vmem:[%s4 + $0x48] sm:$0xff]
      %v498 = vld [vmem:[%s4 + $0x50] sm:$0xff]
      %v499 = vld [vmem:[%s4 + $0x58] sm:$0xff]
      %v500 = vld [vmem:[%s4 + $0x60] sm:$0xff]
      %v501 = vld [vmem:[%s4 + $0x68] sm:$0xff]
      %v502 = vld [vmem:[%s4 + $0x70] sm:$0xff]
      %v503 = vld [vmem:[%s4 + $0x78] sm:$0xff]
      %v504 = vld [vmem:[%s5] sm:$0x1]
      %v506 = vperm.slane %v504, 0
      %508 = vmatpush.msra.mxu0 %v503
      %509 = vmatpush.msra.mxu0 %v502
      %510 = vmatpush.msra.mxu0 %v501
      %511 = vmatpush.msra.mxu0 %v500
      %512 = vmatpush.msra.mxu0 %v499
      %513 = vmatpush.msra.mxu0 %v498
      %514 = vmatpush.msra.mxu0 %v497
      %515 = vmatpush.msra.mxu0 %v496
      %516 = vmatpush.msra.mxu0 %v495
      %517 = vmatpush.msra.mxu0 %v494
      %518 = vmatpush.msra.mxu0 %v493
      %519 = vmatpush.msra.mxu0 %v492
      %520 = vmatpush.msra.mxu0 %v491
      %521 = vmatpush.msra.mxu0 %v490
      %522 = vmatpush.msra.mxu0 %v489
      %523 = vmatpush.msra.mxu0 %v488
      %524 = vmatmul.f32.gmra.mxu0 %v472
      %v525 = vpop.f32.mrf.mxu0
      %v526 = vadd.f32 %v506, %v525
      %527 = vmatmul.f32.gmra.mxu0 %v473
      %v528 = vpop.f32.mrf.mxu0
      %v529 = vadd.f32 %v506, %v528
      %530 = vmatmul.f32.gmra.mxu0 %v474
      %v531 = vpop.f32.mrf.mxu0
      %v532 = vadd.f32 %v506, %v531
      %533 = vmatmul.f32.gmra.mxu0 %v475
      %v534 = vpop.f32.mrf.mxu0
      %v535 = vadd.f32 %v506, %v534
      %536 = vmatmul.f32.gmra.mxu0 %v476
      %v537 = vpop.f32.mrf.mxu0
      %v538 = vadd.f32 %v506, %v537
      %539 = vmatmul.f32.gmra.mxu0 %v477
      %v540 = vpop.f32.mrf.mxu0
      %v541 = vadd.f32 %v506, %v540
      %542 = vmatmul.f32.gmra.mxu0 %v478
      %v543 = vpop.f32.mrf.mxu0
      %v544 = vadd.f32 %v506, %v543
      %545 = vmatmul.f32.gmra.mxu0 %v479
      %v546 = vpop.f32.mrf.mxu0
      %v547 = vadd.f32 %v506, %v546
      %548 = vmatmul.f32.gmra.mxu0 %v480
      %v549 = vpop.f32.mrf.mxu0
      %v550 = vadd.f32 %v506, %v549
      %551 = vmatmul.f32.gmra.mxu0 %v481
      %v552 = vpop.f32.mrf.mxu0
      %v553 = vadd.f32 %v506, %v552
      %554 = vmatmul.f32.gmra.mxu0 %v482
      %v555 = vpop.f32.mrf.mxu0
      %v556 = vadd.f32 %v506, %v555
      %557 = vmatmul.f32.gmra.mxu0 %v483
      %v558 = vpop.f32.mrf.mxu0
      %v559 = vadd.f32 %v506, %v558
      %560 = vmatmul.f32.gmra.mxu0 %v484
      %v561 = vpop.f32.mrf.mxu0
      %v562 = vadd.f32 %v506, %v561
      %563 = vmatmul.f32.gmra.mxu0 %v485
      %v564 = vpop.f32.mrf.mxu0
      %v565 = vadd.f32 %v506, %v564
      %566 = vmatmul.f32.gmra.mxu0 %v486
      %v567 = vpop.f32.mrf.mxu0
      %v568 = vadd.f32 %v506, %v567
      %569 = vmatmul.f32.gmra.mxu0 %v487
      %v570 = vpop.f32.mrf.mxu0
      %v571 = vadd.f32 %v506, %v570
      %572 = vdwg.mxu0
      %v573 = vtanh.pop %v526
      %v574 = vtanh.pop %v529
      %v575 = vtanh.pop %v532
      %v576 = vtanh.pop %v535
      %v577 = vtanh.pop %v538
      %v578 = vtanh.pop %v541
      %v579 = vtanh.pop %v544
      %v580 = vtanh.pop %v547
      %v581 = vtanh.pop %v550
      %v582 = vtanh.pop %v553
      %v583 = vtanh.pop %v556
      %v584 = vtanh.pop %v559
      %v585 = vtanh.pop %v562
      %v586 = vtanh.pop %v565
      %v587 = vtanh.pop %v568
      %v588 = vtanh.pop %v571
      %589 = vst [vmem:[#allocation3] sm:$0xff] %v573
      %590 = vst [vmem:[#allocation3 + $0x8] sm:$0xff] %v574
      %591 = vst [vmem:[#allocation3 + $0x10] sm:$0xff] %v575
      %592 = vst [vmem:[#allocation3 + $0x18] sm:$0xff] %v576
      %593 = vst [vmem:[#allocation3 + $0x20] sm:$0xff] %v577
      %594 = vst [vmem:[#allocation3 + $0x28] sm:$0xff] %v578
      %595 = vst [vmem:[#allocation3 + $0x30] sm:$0xff] %v579
      %596 = vst [vmem:[#allocation3 + $0x38] sm:$0xff] %v580
      %597 = vst [vmem:[#allocation3 + $0x40] sm:$0xff] %v581
      %598 = vst [vmem:[#allocation3 + $0x48] sm:$0xff] %v582
      %599 = vst [vmem:[#allocation3 + $0x50] sm:$0xff] %v583
      %600 = vst [vmem:[#allocation3 + $0x58] sm:$0xff] %v584
      %601 = vst [vmem:[#allocation3 + $0x60] sm:$0xff] %v585
      %602 = vst [vmem:[#allocation3 + $0x68] sm:$0xff] %v586
      %603 = vst [vmem:[#allocation3 + $0x70] sm:$0xff] %v587
      %604 = vst [vmem:[#allocation3 + $0x78] sm:$0xff] %v588
    $region33: #{tpu_custom_call.1} parent=1 // pred_fallthru
      _
    // Predicated region
    $region34: #{tpu_custom_call.1} parent=1 // pred_check
      _
    $region35: #{tpu_custom_call.1} parent=1 // pred_check_branch
      %606 = sbr.rel (0) target = $region37
    $region36: #{tpu_custom_call.1} parent=1 // pred_region
      %608 = vsyncadd [#allocation4], 0
      %s609 = sshll.u32 [#allocation3], 4
      %s610 = int_to_ptr.vmem [resolvable:$true] %s609
      %s611 = sshll.u32 %s6, 4
      %s612 = int_to_ptr.hbm [resolvable:$true] %s611
      %617 = dma.vmem_to_hbm [thread:$0]  %s610, 2048, %s612, [#allocation4], 128, 128, 8
    $region37: #{tpu_custom_call.1} parent=1 // pred_fallthru
      _
    // Predicated region
    $region38: #{tpu_custom_call.1} parent=1 // pred_check
      _
    $region39: #{tpu_custom_call.1} parent=1 // pred_check_branch
      %619 = sbr.rel (0) target = $region41
    $region40: #{tpu_custom_call.1} parent=1 // pred_region
      %621 = dma.done [#allocation4], 2048
    $region41: #{tpu_custom_call.1} parent=1 // pred_fallthru
      _
    %622 = vsyncpa [#allocation4], 1

</llo_original>
